<compile_context>
chip_gen: v6e
topology: v6e:2x2x1
jax: 0.10.0
libtpu: 0.0.40
codegen_flags: <defaults>
</compile_context>

<pallas_src>
import jax
import jax.numpy as jnp
import numpy as np
from jax.experimental import pallas as pl
from jax.experimental.pallas import tpu as pltpu


def _round_up(n, m):
    return ((n + m - 1) // m) * m


def _softplus(z):
    # numerically-stable softplus using only exp/log (both EUP ops)
    return jnp.maximum(z, 0.0) + jnp.log(1.0 + jnp.exp(-jnp.abs(z)))


def make_latentf_kernel(sizes):
    """sizes = [1] + hidden_sizes + [channels_out] (static Python ints)."""
    c_out = sizes[-1]

    def kernel(theta_ref, x_ref, o_ref):
        # x_ref: (1, TM) block of the transposed input; lanes = flattened batch.
        chans = [x_ref[...]]                      # per-channel (1, TM) rows
        off = 0
        for li in range(1, len(sizes)):
            fin, fout = sizes[li - 1], sizes[li]
            w_nl = off; off += fout * fin         # no_linear weight (fout, fin)
            b_nl = off; off += fout               # no_linear bias   (fout,)
            w_l = off;  off += fin                # linear weight    (1, fin)
            b_l = off;  off += 1                  # linear bias      (1,)

            # linear(x): one scalar row, broadcast over all fout channels
            lin = chans[0] * theta_ref[w_l]
            for k in range(1, fin):
                lin = lin + chans[k] * theta_ref[w_l + k]
            lin = lin + theta_ref[b_l]

            new_chans = []
            for j in range(fout):
                z = chans[0] * theta_ref[w_nl + j * fin]
                for k in range(1, fin):
                    z = z + chans[k] * theta_ref[w_nl + j * fin + k]
                z = z + theta_ref[b_nl + j]
                new_chans.append(lin + _softplus(z))
            chans = new_chans

        for j in range(c_out):
            o_ref[pl.ds(j, 1), :] = chans[j]

    return kernel


def latentf_forward(x, params, hidden_sizes=(3,), channels_out=2, block_m=2048):
    """x: (..., 1) float32; params: list of (W_nl, b_nl, W_l, b_l) per layer."""
    sizes = [1] + list(hidden_sizes) + [channels_out]
    assert x.shape[-1] == sizes[0], x.shape
    lead = x.shape[:-1]
    m = int(np.prod(lead)) if lead else 1
    c_out = sizes[-1]

    # Pack all weights/biases into one small f32 vector (lives in SMEM).
    theta = jnp.concatenate(
        [jnp.ravel(t).astype(jnp.float32) for layer in params for t in layer])

    # Transposed, lane-dense layout: (1, M_pad) input, (c_out, M_pad) output.
    x_t = x.reshape(m, 1).astype(jnp.float32).T
    tm = min(block_m, _round_up(m, 128))
    m_pad = _round_up(m, tm)
    if m_pad != m:
        x_t = jnp.pad(x_t, ((0, 0), (0, m_pad - m)))

    # Advisory cost estimate: tiny elementwise / writeback-bound kernel.
    flops_pe, trans_pe = 0, 0
    for li in range(1, len(sizes)):
        fin, fout = sizes[li - 1], sizes[li]
        flops_pe += 2 * fin * fout + fout + 2 * fin + 1 + fout
        trans_pe += 2 * fout

    out_t = pl.pallas_call(
        make_latentf_kernel(sizes),
        out_shape=jax.ShapeDtypeStruct((c_out, m_pad), jnp.float32),
        grid=(m_pad // tm,),
        in_specs=[
            pl.BlockSpec(memory_space=pltpu.MemorySpace.SMEM),   # packed params
            pl.BlockSpec((1, tm), lambda i: (0, i)),             # x^T tile
        ],
        out_specs=pl.BlockSpec((c_out, tm), lambda i: (0, i)),
        compiler_params=pltpu.CompilerParams(
            dimension_semantics=("parallel",)),
        cost_estimate=pl.CostEstimate(
            flops=m_pad * flops_pe,
            transcendentals=m_pad * trans_pe,
            bytes_accessed=4 * (m_pad * (1 + c_out) + int(theta.shape[0]))),
    )(theta, x_t)

    # Layout plumbing back to the PyTorch output shape (..., channels_out).
    return out_t[:, :m].T.reshape(lead + (c_out,))


def latentf_ref(x, params):
    # Pure-JAX reference mirroring the PyTorch forward exactly.
    for w_nl, b_nl, w_l, b_l in params:
        h = jax.nn.softplus(x @ w_nl.T + b_nl)
        lin = x @ w_l.T + b_l
        x = lin * jnp.ones_like(h) + h
    return x


def init_params(key, hidden_sizes=(3,), channels_out=2):
    sizes = [1] + list(hidden_sizes) + [channels_out]
    params = []
    for i in range(1, len(sizes)):
        fin, fout = sizes[i - 1], sizes[i]
        key, k1, k2, k3, k4 = jax.random.split(key, 5)
        bound = 1.0 / float(np.sqrt(fin))
        params.append((
            jax.random.uniform(k1, (fout, fin), jnp.float32, -bound, bound),
            jax.random.uniform(k2, (fout,), jnp.float32, -bound, bound),
            jax.random.uniform(k3, (1, fin), jnp.float32, -bound, bound),
            jax.random.uniform(k4, (1,), jnp.float32, -bound, bound),
        ))
    return params


if __name__ == "__main__":
    key = jax.random.PRNGKey(0)
    kp, kx = jax.random.split(key)

    hidden_sizes = (3,)
    channels_out = 2
    params = init_params(kp, hidden_sizes, channels_out)

    batch, seq = 2, 8
    x = jax.random.normal(kx, (batch, seq, 1), dtype=jnp.float32)

    out = latentf_forward(x, params, hidden_sizes, channels_out)
    out = jax.block_until_ready(out)

    ref = latentf_ref(x, params)
    assert out.shape == (batch, seq, channels_out), out.shape
    assert out.dtype == jnp.float32, out.dtype
    err = float(jnp.max(jnp.abs(out - ref)))
    assert err < 1e-4, f"max abs err {err}"

    print("KERNEL_OK")
</pallas_src>

<mosaic_0001>
module attributes {stable_mosaic.version = 11 : i64} {
  func.func @kernel(%arg0: i32, %arg1: memref<20xf32, #tpu.memory_space<smem>>, %arg2: memref<1x128xf32, #tpu.memory_space<vmem>>, %arg3: memref<2x128xf32, #tpu.memory_space<vmem>>) attributes {dimension_semantics = [#tpu.dimension_semantics<parallel>], iteration_bounds = array<i64: 1>, scalar_prefetch = 0 : i64, scratch_operands = 0 : i64, tpu.core_type = #tpu.core_type<tc>, window_params = [{transform_indices = @transform_0, window_bounds = array<i64: 20>}, {transform_indices = @transform_1, window_bounds = array<i64: 1, 128>}, {transform_indices = @transform_2, window_bounds = array<i64: 2, 128>}]} {
    %c0 = arith.constant 0 : index
    %c0_0 = arith.constant 0 : index
    %0 = vector.load %arg2[%c0, %c0_0] : memref<1x128xf32, #tpu.memory_space<vmem>>, vector<1x128xf32>
    %c6 = arith.constant 6 : index
    %1 = memref.load %arg1[%c6] : memref<20xf32, #tpu.memory_space<smem>>
    %2 = vector.broadcast %1 : f32 to vector<1x128xf32>
    %3 = arith.mulf %0, %2 : vector<1x128xf32>
    %c7 = arith.constant 7 : index
    %4 = memref.load %arg1[%c7] : memref<20xf32, #tpu.memory_space<smem>>
    %5 = vector.broadcast %4 : f32 to vector<1x128xf32>
    %6 = arith.addf %3, %5 : vector<1x128xf32>
    %c0_1 = arith.constant 0 : index
    %7 = memref.load %arg1[%c0_1] : memref<20xf32, #tpu.memory_space<smem>>
    %8 = vector.broadcast %7 : f32 to vector<1x128xf32>
    %9 = arith.mulf %0, %8 : vector<1x128xf32>
    %c3 = arith.constant 3 : index
    %10 = memref.load %arg1[%c3] : memref<20xf32, #tpu.memory_space<smem>>
    %11 = vector.broadcast %10 : f32 to vector<1x128xf32>
    %12 = arith.addf %9, %11 : vector<1x128xf32>
    %cst = arith.constant 0.000000e+00 : f32
    %13 = vector.broadcast %cst : f32 to vector<1x128xf32>
    %14 = arith.maximumf %12, %13 : vector<1x128xf32>
    %15 = math.absf %12 : vector<1x128xf32>
    %cst_2 = arith.constant 0.000000e+00 : f32
    %16 = vector.broadcast %cst_2 : f32 to vector<1x128xf32>
    %17 = arith.subf %16, %15 : vector<1x128xf32>
    %18 = math.exp %17 : vector<1x128xf32>
    %cst_3 = arith.constant 1.000000e+00 : f32
    %19 = vector.broadcast %cst_3 : f32 to vector<1x128xf32>
    %20 = arith.addf %19, %18 : vector<1x128xf32>
    %21 = math.log %20 : vector<1x128xf32>
    %22 = arith.addf %14, %21 : vector<1x128xf32>
    %23 = arith.addf %6, %22 : vector<1x128xf32>
    %c1 = arith.constant 1 : index
    %24 = memref.load %arg1[%c1] : memref<20xf32, #tpu.memory_space<smem>>
    %25 = vector.broadcast %24 : f32 to vector<1x128xf32>
    %26 = arith.mulf %0, %25 : vector<1x128xf32>
    %c4 = arith.constant 4 : index
    %27 = memref.load %arg1[%c4] : memref<20xf32, #tpu.memory_space<smem>>
    %28 = vector.broadcast %27 : f32 to vector<1x128xf32>
    %29 = arith.addf %26, %28 : vector<1x128xf32>
    %cst_4 = arith.constant 0.000000e+00 : f32
    %30 = vector.broadcast %cst_4 : f32 to vector<1x128xf32>
    %31 = arith.maximumf %29, %30 : vector<1x128xf32>
    %32 = math.absf %29 : vector<1x128xf32>
    %cst_5 = arith.constant 0.000000e+00 : f32
    %33 = vector.broadcast %cst_5 : f32 to vector<1x128xf32>
    %34 = arith.subf %33, %32 : vector<1x128xf32>
    %35 = math.exp %34 : vector<1x128xf32>
    %cst_6 = arith.constant 1.000000e+00 : f32
    %36 = vector.broadcast %cst_6 : f32 to vector<1x128xf32>
    %37 = arith.addf %36, %35 : vector<1x128xf32>
    %38 = math.log %37 : vector<1x128xf32>
    %39 = arith.addf %31, %38 : vector<1x128xf32>
    %40 = arith.addf %6, %39 : vector<1x128xf32>
    %c2 = arith.constant 2 : index
    %41 = memref.load %arg1[%c2] : memref<20xf32, #tpu.memory_space<smem>>
    %42 = vector.broadcast %41 : f32 to vector<1x128xf32>
    %43 = arith.mulf %0, %42 : vector<1x128xf32>
    %c5 = arith.constant 5 : index
    %44 = memref.load %arg1[%c5] : memref<20xf32, #tpu.memory_space<smem>>
    %45 = vector.broadcast %44 : f32 to vector<1x128xf32>
    %46 = arith.addf %43, %45 : vector<1x128xf32>
    %cst_7 = arith.constant 0.000000e+00 : f32
    %47 = vector.broadcast %cst_7 : f32 to vector<1x128xf32>
    %48 = arith.maximumf %46, %47 : vector<1x128xf32>
    %49 = math.absf %46 : vector<1x128xf32>
    %cst_8 = arith.constant 0.000000e+00 : f32
    %50 = vector.broadcast %cst_8 : f32 to vector<1x128xf32>
    %51 = arith.subf %50, %49 : vector<1x128xf32>
    %52 = math.exp %51 : vector<1x128xf32>
    %cst_9 = arith.constant 1.000000e+00 : f32
    %53 = vector.broadcast %cst_9 : f32 to vector<1x128xf32>
    %54 = arith.addf %53, %52 : vector<1x128xf32>
    %55 = math.log %54 : vector<1x128xf32>
    %56 = arith.addf %48, %55 : vector<1x128xf32>
    %57 = arith.addf %6, %56 : vector<1x128xf32>
    %c16 = arith.constant 16 : index
    %58 = memref.load %arg1[%c16] : memref<20xf32, #tpu.memory_space<smem>>
    %59 = vector.broadcast %58 : f32 to vector<1x128xf32>
    %60 = arith.mulf %23, %59 : vector<1x128xf32>
    %c17 = arith.constant 17 : index
    %61 = memref.load %arg1[%c17] : memref<20xf32, #tpu.memory_space<smem>>
    %62 = vector.broadcast %61 : f32 to vector<1x128xf32>
    %63 = arith.mulf %40, %62 : vector<1x128xf32>
    %64 = arith.addf %60, %63 : vector<1x128xf32>
    %c18 = arith.constant 18 : index
    %65 = memref.load %arg1[%c18] : memref<20xf32, #tpu.memory_space<smem>>
    %66 = vector.broadcast %65 : f32 to vector<1x128xf32>
    %67 = arith.mulf %57, %66 : vector<1x128xf32>
    %68 = arith.addf %64, %67 : vector<1x128xf32>
    %c19 = arith.constant 19 : index
    %69 = memref.load %arg1[%c19] : memref<20xf32, #tpu.memory_space<smem>>
    %70 = vector.broadcast %69 : f32 to vector<1x128xf32>
    %71 = arith.addf %68, %70 : vector<1x128xf32>
    %c8 = arith.constant 8 : index
    %72 = memref.load %arg1[%c8] : memref<20xf32, #tpu.memory_space<smem>>
    %73 = vector.broadcast %72 : f32 to vector<1x128xf32>
    %74 = arith.mulf %23, %73 : vector<1x128xf32>
    %c9 = arith.constant 9 : index
    %75 = memref.load %arg1[%c9] : memref<20xf32, #tpu.memory_space<smem>>
    %76 = vector.broadcast %75 : f32 to vector<1x128xf32>
    %77 = arith.mulf %40, %76 : vector<1x128xf32>
    %78 = arith.addf %74, %77 : vector<1x128xf32>
    %c10 = arith.constant 10 : index
    %79 = memref.load %arg1[%c10] : memref<20xf32, #tpu.memory_space<smem>>
    %80 = vector.broadcast %79 : f32 to vector<1x128xf32>
    %81 = arith.mulf %57, %80 : vector<1x128xf32>
    %82 = arith.addf %78, %81 : vector<1x128xf32>
    %c14 = arith.constant 14 : index
    %83 = memref.load %arg1[%c14] : memref<20xf32, #tpu.memory_space<smem>>
    %84 = vector.broadcast %83 : f32 to vector<1x128xf32>
    %85 = arith.addf %82, %84 : vector<1x128xf32>
    %cst_10 = arith.constant 0.000000e+00 : f32
    %86 = vector.broadcast %cst_10 : f32 to vector<1x128xf32>
    %87 = arith.maximumf %85, %86 : vector<1x128xf32>
    %88 = math.absf %85 : vector<1x128xf32>
    %cst_11 = arith.constant 0.000000e+00 : f32
    %89 = vector.broadcast %cst_11 : f32 to vector<1x128xf32>
    %90 = arith.subf %89, %88 : vector<1x128xf32>
    %91 = math.exp %90 : vector<1x128xf32>
    %cst_12 = arith.constant 1.000000e+00 : f32
    %92 = vector.broadcast %cst_12 : f32 to vector<1x128xf32>
    %93 = arith.addf %92, %91 : vector<1x128xf32>
    %94 = math.log %93 : vector<1x128xf32>
    %95 = arith.addf %87, %94 : vector<1x128xf32>
    %96 = arith.addf %71, %95 : vector<1x128xf32>
    %c11 = arith.constant 11 : index
    %97 = memref.load %arg1[%c11] : memref<20xf32, #tpu.memory_space<smem>>
    %98 = vector.broadcast %97 : f32 to vector<1x128xf32>
    %99 = arith.mulf %23, %98 : vector<1x128xf32>
    %c12 = arith.constant 12 : index
    %100 = memref.load %arg1[%c12] : memref<20xf32, #tpu.memory_space<smem>>
    %101 = vector.broadcast %100 : f32 to vector<1x128xf32>
    %102 = arith.mulf %40, %101 : vector<1x128xf32>
    %103 = arith.addf %99, %102 : vector<1x128xf32>
    %c13 = arith.constant 13 : index
    %104 = memref.load %arg1[%c13] : memref<20xf32, #tpu.memory_space<smem>>
    %105 = vector.broadcast %104 : f32 to vector<1x128xf32>
    %106 = arith.mulf %57, %105 : vector<1x128xf32>
    %107 = arith.addf %103, %106 : vector<1x128xf32>
    %c15 = arith.constant 15 : index
    %108 = memref.load %arg1[%c15] : memref<20xf32, #tpu.memory_space<smem>>
    %109 = vector.broadcast %108 : f32 to vector<1x128xf32>
    %110 = arith.addf %107, %109 : vector<1x128xf32>
    %cst_13 = arith.constant 0.000000e+00 : f32
    %111 = vector.broadcast %cst_13 : f32 to vector<1x128xf32>
    %112 = arith.maximumf %110, %111 : vector<1x128xf32>
    %113 = math.absf %110 : vector<1x128xf32>
    %cst_14 = arith.constant 0.000000e+00 : f32
    %114 = vector.broadcast %cst_14 : f32 to vector<1x128xf32>
    %115 = arith.subf %114, %113 : vector<1x128xf32>
    %116 = math.exp %115 : vector<1x128xf32>
    %cst_15 = arith.constant 1.000000e+00 : f32
    %117 = vector.broadcast %cst_15 : f32 to vector<1x128xf32>
    %118 = arith.addf %117, %116 : vector<1x128xf32>
    %119 = math.log %118 : vector<1x128xf32>
    %120 = arith.addf %112, %119 : vector<1x128xf32>
    %121 = arith.addf %71, %120 : vector<1x128xf32>
    %c0_16 = arith.constant 0 : index
    %c0_17 = arith.constant 0 : index
    %122 = vector.load %arg3[%c0_16, %c0_17] : memref<2x128xf32, #tpu.memory_space<vmem>>, vector<1x128xf32>
    tpu.vector_store %arg3[%c0_16, %c0_17], %96 {strides = array<i32>} : memref<2x128xf32, #tpu.memory_space<vmem>>, vector<1x128xf32>,
    %c1_18 = arith.constant 1 : index
    %c0_19 = arith.constant 0 : index
    %123 = vector.load %arg3[%c1_18, %c0_19] : memref<2x128xf32, #tpu.memory_space<vmem>>, vector<1x128xf32>
    tpu.vector_store %arg3[%c1_18, %c0_19], %121 {strides = array<i32>} : memref<2x128xf32, #tpu.memory_space<vmem>>, vector<1x128xf32>,
    return
  }
  func.func @transform_0(%arg0: i32) -> i32 {
    %c0_i32 = arith.constant 0 : i32
    %c0_i32_0 = arith.constant 0 : i32
    return %c0_i32 : i32
  }
  func.func @transform_1(%arg0: i32) -> (i32, i32) {
    %c0_i32 = arith.constant 0 : i32
    %c0_i32_0 = arith.constant 0 : i32
    return %c0_i32, %arg0 : i32, i32
  }
  func.func @transform_2(%arg0: i32) -> (i32, i32) {
    %c0_i32 = arith.constant 0 : i32
    %c0_i32_0 = arith.constant 0 : i32
    return %c0_i32, %arg0 : i32, i32
  }
}

</mosaic_0001>

<llo_original>
// kernel: tpu_custom_call.1
$region0: #{tpu_custom_call.1}
  #allocation0 [shape = 'u32[]', space=smem, size = 0x4, offset = 0x4, fixed_abs, tag = 'smem constant byte address 0x4 - core index']
  #allocation1 [shape = 'u32[144,128]{1,0:T(1,128)}', space=vmem, size = 0x12000, scoped, tag = 'internal scratch']
  %s0 = inlined_call_operand.hbm [shape: f32[20], index: 0, kind: input, shape index: {}]
  %s1 = inlined_call_operand.vmem [shape: f32[1,128], index: 1, kind: input, shape index: {}]
  %s2 = inlined_call_operand.hbm [shape: f32[2,128], index: 2, kind: output, shape index: {}]
  %s3 = sld [smem:[#allocation0]]
  $region22: #{tpu_custom_call.1} parent=0
    _
  %s5 = ssub.s32 1, %s3
  %s6 = scalar_select 0, %s5, %s3
  $region1: #{tpu_custom_call.1} parent=0
    #allocation2 [shape = 'u8[512]{0}', space=smem, size = 0x200, scoped, tag = 'input window, operand 0, single buffered']
    #allocation3 [shape = 's32[1]{0}', space=sflag, size = 0x4, scoped, tag = 'scoped memory for tpu_custom_call.1']
    #allocation4 [shape = 's32[1]{0}', space=sflag, size = 0x4, scoped, tag = 'scoped memory for tpu_custom_call.1']
    #allocation5 [shape = 'u8[1024]{0}', space=vmem, size = 0x400, scoped, tag = 'output window, operand 0, single buffered']
    %7 = vsyncpa [#allocation4], 0
    %8 = vsyncpa [#allocation3], 0
    // Predicated region
    $region2: #{tpu_custom_call.1} parent=1 // pred_check
      _
    $region3: #{tpu_custom_call.1} parent=1 // pred_check_branch
      %10 = sbr.rel (0) target = $region5
    $region4: #{tpu_custom_call.1} parent=1 // pred_region
      %s12 = ssub.s32 16, 16
      %13 = vsyncadd [#allocation4], %s12
      %16 = dma.hbm_to_smem %s0, 16, [#allocation2], [#allocation4]
    $region5: #{tpu_custom_call.1} parent=1 // pred_fallthru
      _
    // Predicated region
    $region6: #{tpu_custom_call.1} parent=1 // pred_check
      _
    $region7: #{tpu_custom_call.1} parent=1 // pred_check_branch
      %18 = sbr.rel (0) target = $region9
    $region8: #{tpu_custom_call.1} parent=1 // pred_region
      _
    $region9: #{tpu_custom_call.1} parent=1 // pred_fallthru
      _
    // Predicated region
    $region10: #{tpu_custom_call.1} parent=1 // pred_check
      _
    $region11: #{tpu_custom_call.1} parent=1 // pred_check_branch
      %20 = sbr.rel (0) target = $region13
    $region12: #{tpu_custom_call.1} parent=1 // pred_region
      %21 = dma.done [#allocation4], 16
    $region13: #{tpu_custom_call.1} parent=1 // pred_fallthru
      _
    %22 = sfence
    %v23 = vld [vmem:[%s1] sm:$0x1]
    %s24 = sld [smem:[#allocation2 + $0x6]]
    %v25 = vstv %s24
    %v26 = vmul.f32 %v23, %v25
    %s27 = sld [smem:[#allocation2 + $0x7]]
    %v28 = vstv %s27
    %v29 = vadd.f32 %v26, %v28
    %s30 = sld [smem:[#allocation2]]
    %v31 = vstv %s30
    %v32 = vmul.f32 %v23, %v31
    %s33 = sld [smem:[#allocation2 + $0x3]]
    %v34 = vstv %s33
    %v35 = vadd.f32 %v32, %v34
    %v36 = vmax.f32 %v35, 0.0
    %v37 = vand.u32 2147483647, %v35
    %v38 = vsub.f32 0.0, %v37
    %v39 = vmul.f32 %v38, 1.442695
    %v40 = vpow.pop %v39
    %v41 = vadd.f32 %v40, 1.0
    %v42 = vlog2.pop %v41
    %v43 = vmul.f32 %v42, 0.6931472
    %v44 = vadd.f32 %v36, %v43
    %v45 = vadd.f32 %v29, %v44
    %s46 = sld [smem:[#allocation2 + $0x1]]
    %v47 = vstv %s46
    %v48 = vmul.f32 %v23, %v47
    %s49 = sld [smem:[#allocation2 + $0x4]]
    %v50 = vstv %s49
    %v51 = vadd.f32 %v48, %v50
    %v52 = vmax.f32 %v51, 0.0
    %v53 = vand.u32 2147483647, %v51
    %v54 = vsub.f32 0.0, %v53
    %v55 = vmul.f32 %v54, 1.442695
    %v56 = vpow.pop %v55
    %v57 = vadd.f32 %v56, 1.0
    %v58 = vlog2.pop %v57
    %v59 = vmul.f32 %v58, 0.6931472
    %v60 = vadd.f32 %v52, %v59
    %v61 = vadd.f32 %v29, %v60
    %s62 = sld [smem:[#allocation2 + $0x2]]
    %v63 = vstv %s62
    %v64 = vmul.f32 %v23, %v63
    %s65 = sld [smem:[#allocation2 + $0x5]]
    %v66 = vstv %s65
    %v67 = vadd.f32 %v64, %v66
    %v68 = vmax.f32 %v67, 0.0
    %v69 = vand.u32 2147483647, %v67
    %v70 = vsub.f32 0.0, %v69
    %v71 = vmul.f32 %v70, 1.442695
    %v72 = vpow.pop %v71
    %v73 = vadd.f32 %v72, 1.0
    %v74 = vlog2.pop %v73
    %v75 = vmul.f32 %v74, 0.6931472
    %v76 = vadd.f32 %v68, %v75
    %v77 = vadd.f32 %v29, %v76
    %s78 = sld [smem:[#allocation2 + $0x10]]
    %v79 = vstv %s78
    %v80 = vmul.f32 %v45, %v79
    %s81 = sld [smem:[#allocation2 + $0x11]]
    %v82 = vstv %s81
    %v83 = vmul.f32 %v61, %v82
    %v84 = vadd.f32 %v80, %v83
    %s85 = sld [smem:[#allocation2 + $0x12]]
    %v86 = vstv %s85
    %v87 = vmul.f32 %v77, %v86
    %v88 = vadd.f32 %v84, %v87
    %s89 = sld [smem:[#allocation2 + $0x13]]
    %v90 = vstv %s89
    %v91 = vadd.f32 %v88, %v90
    %s92 = sld [smem:[#allocation2 + $0x8]]
    %v93 = vstv %s92
    %v94 = vmul.f32 %v45, %v93
    %s95 = sld [smem:[#allocation2 + $0x9]]
    %v96 = vstv %s95
    %v97 = vmul.f32 %v61, %v96
    %v98 = vadd.f32 %v94, %v97
    %s99 = sld [smem:[#allocation2 + $0xa]]
    %v100 = vstv %s99
    %v101 = vmul.f32 %v77, %v100
    %v102 = vadd.f32 %v98, %v101
    %s103 = sld [smem:[#allocation2 + $0xe]]
    %v104 = vstv %s103
    %v105 = vadd.f32 %v102, %v104
    %v106 = vmax.f32 %v105, 0.0
    %v107 = vand.u32 2147483647, %v105
    %v108 = vsub.f32 0.0, %v107
    %v109 = vmul.f32 %v108, 1.442695
    %v110 = vpow.pop %v109
    %v111 = vadd.f32 %v110, 1.0
    %v112 = vlog2.pop %v111
    %v113 = vmul.f32 %v112, 0.6931472
    %v114 = vadd.f32 %v106, %v113
    %v115 = vadd.f32 %v91, %v114
    %s116 = sld [smem:[#allocation2 + $0xb]]
    %v117 = vstv %s116
    %v118 = vmul.f32 %v45, %v117
    %s119 = sld [smem:[#allocation2 + $0xc]]
    %v120 = vstv %s119
    %v121 = vmul.f32 %v61, %v120
    %v122 = vadd.f32 %v118, %v121
    %s123 = sld [smem:[#allocation2 + $0xd]]
    %v124 = vstv %s123
    %v125 = vmul.f32 %v77, %v124
    %v126 = vadd.f32 %v122, %v125
    %s127 = sld [smem:[#allocation2 + $0xf]]
    %v128 = vstv %s127
    %v129 = vadd.f32 %v126, %v128
    %v130 = vmax.f32 %v129, 0.0
    %v131 = vand.u32 2147483647, %v129
    %v132 = vsub.f32 0.0, %v131
    %v133 = vmul.f32 %v132, 1.442695
    %v134 = vpow.pop %v133
    %v135 = vadd.f32 %v134, 1.0
    %v136 = vlog2.pop %v135
    %v137 = vmul.f32 %v136, 0.6931472
    %v138 = vadd.f32 %v130, %v137
    %v139 = vadd.f32 %v91, %v138
    %140 = vst [vmem:[#allocation5] sm:$0x1] %v115
    %141 = vst [vmem:[#allocation5 + $0x1] sm:$0x1] %v139
    // Predicated region
    $region14: #{tpu_custom_call.1} parent=1 // pred_check
      _
    $region15: #{tpu_custom_call.1} parent=1 // pred_check_branch
      %143 = sbr.rel (0) target = $region17
    $region16: #{tpu_custom_call.1} parent=1 // pred_region
      %s145 = ssub.s32 32, 32
      %146 = vsyncadd [#allocation3], %s145
      %s148 = sshll.u32 [#allocation5], 4
      %s149 = int_to_ptr.vmem [resolvable:$true] %s148
      %151 = dma.vmem_to_hbm [thread:$0]  %s149, 32, %s2, [#allocation3]
    $region17: #{tpu_custom_call.1} parent=1 // pred_fallthru
      _
    // Predicated region
    $region18: #{tpu_custom_call.1} parent=1 // pred_check
      _
    $region19: #{tpu_custom_call.1} parent=1 // pred_check_branch
      %153 = sbr.rel (0) target = $region21
    $region20: #{tpu_custom_call.1} parent=1 // pred_region
      %154 = dma.done [#allocation3], 32
    $region21: #{tpu_custom_call.1} parent=1 // pred_fallthru
      _
    %155 = vsyncpa [#allocation3], 1
    %156 = vsyncpa [#allocation4], 1

</llo_original>
